<compile_context>
chip_gen: v6e
topology: v6e:2x2x1
jax: 0.10.0
libtpu: 0.0.40
codegen_flags: <defaults>
</compile_context>

<pallas_src>
import jax
import jax.numpy as jnp
from jax.experimental import pallas as pl
from jax.experimental.pallas import tpu as pltpu


def _round_up(x: int, m: int) -> int:
    return ((x + m - 1) // m) * m


def _pick_tile(padded: int, unit: int, cap: int) -> int:
    """Largest multiple of `unit` that divides `padded` and is <= cap."""
    n = padded // unit
    cap_units = max(1, cap // unit)
    best = 1
    for d in range(1, min(n, cap_units) + 1):
        if n % d == 0:
            best = d
    return best * unit


def _split_tile(padded: int, unit: int, tile: int) -> int:
    """Largest tile <= tile//2 (multiple of `unit`, divides `padded`); `tile` if impossible."""
    n = padded // unit
    target = (tile // unit) // 2
    for d in range(target, 0, -1):
        if n % d == 0:
            return d * unit
    return tile


def unit_linear_kernel(x_ref, w_ref, b_ref, o_ref, ssq_ref):
    """Tiled matmul with fused per-column L2-norm + bias epilogue.

    x_ref: (tm, tk)   w_ref: (tk, tn)   b_ref: (1, tn)
    o_ref: (tm, tn) f32  -- resident across the K axis (block index (i, j) fixed along k)
    ssq_ref: (1, tn) f32 scratch -- running sum of squares of W columns
    """
    k = pl.program_id(2)

    @pl.when(k == 0)
    def _():
        o_ref[...] = jnp.zeros_like(o_ref)
        ssq_ref[...] = jnp.zeros_like(ssq_ref)

    w = w_ref[...]
    # MXU partial matmul, accumulated in the resident f32 output block.
    o_ref[...] += jnp.dot(x_ref[...], w, preferred_element_type=jnp.float32)
    # Fused column-norm partial: sublane reduce goes to XLU/VPU, hides under the MXU.
    ssq_ref[...] += jnp.sum(w * w, axis=0, keepdims=True)

    @pl.when(k == pl.num_programs(2) - 1)
    def _():
        inv_norm = 1.0 / (1e-7 + jnp.sqrt(ssq_ref[...]))   # (1, tn), broadcasts over rows
        o_ref[...] = o_ref[...] * inv_norm + b_ref[...]


def unit_linear(x, weight, bias):
    """x: (B, in_dim) f32, weight: (in_dim, out_dim) f32, bias: (out_dim,) f32."""
    B, in_dim = x.shape
    out_dim = weight.shape[1]

    # 8/128-aligned logical extents.
    Mp = _round_up(B, 8)
    Kp = _round_up(in_dim, 128)
    Np = _round_up(out_dim, 128)

    # Tiles that exactly divide the padded dims (no padded-tile compute), capped at 512.
    tm = _pick_tile(Mp, 8, 512)
    tk = _pick_tile(Kp, 128, 512)
    tn = _pick_tile(Np, 128, 512)

    # Keep >= 2 blocks along a parallel axis when possible (feeds both v7x TensorCores).
    if Mp // tm == 1 and Np // tn == 1:
        tm_split = _split_tile(Mp, 8, tm)
        if tm_split != tm:
            tm = tm_split
        else:
            tn = _split_tile(Np, 128, tn)

    # Pad only when not already aligned (avoids materializing extra HBM copies).
    # Zero K rows change neither the matmul nor the column norms; padded N columns have
    # zero sum-of-squares and zero bias, so their outputs are exactly 0 and are sliced off.
    x_p = x if (Mp == B and Kp == in_dim) else jnp.pad(
        x, ((0, Mp - B), (0, Kp - in_dim)))
    w_p = weight if (Kp == in_dim and Np == out_dim) else jnp.pad(
        weight, ((0, Kp - in_dim), (0, Np - out_dim)))
    bias2d = bias.reshape(1, out_dim)
    b_p = bias2d if Np == out_dim else jnp.pad(bias2d, ((0, 0), (0, Np - out_dim)))

    grid = (Mp // tm, Np // tn, Kp // tk)

    cost = pl.CostEstimate(
        flops=2 * Mp * Np * Kp + 2 * Kp * Np + 3 * Mp * Np,
        transcendentals=Np,  # sqrt per output column
        bytes_accessed=4 * (Mp * Kp + Kp * Np + Np + Mp * Np),
    )

    out_p = pl.pallas_call(
        unit_linear_kernel,
        out_shape=jax.ShapeDtypeStruct((Mp, Np), jnp.float32),
        grid_spec=pltpu.PrefetchScalarGridSpec(
            num_scalar_prefetch=0,
            grid=grid,
            in_specs=[
                pl.BlockSpec((tm, tk), lambda i, j, k: (i, k)),   # x
                pl.BlockSpec((tk, tn), lambda i, j, k: (k, j)),   # W
                pl.BlockSpec((1, tn), lambda i, j, k: (0, j)),    # bias
            ],
            out_specs=pl.BlockSpec((tm, tn), lambda i, j, k: (i, j)),
            scratch_shapes=[pltpu.VMEM((1, tn), jnp.float32)],    # column sum-of-squares
        ),
        compiler_params=pltpu.CompilerParams(
            dimension_semantics=("parallel", "parallel", "arbitrary"),
        ),
        cost_estimate=cost,
    )(x_p, w_p, b_p)

    if Mp == B and Np == out_dim:
        return out_p
    return out_p[:B, :out_dim]


def _reference(x, weight, bias):
    w_n = weight / (1e-7 + jnp.sqrt(jnp.sum(weight ** 2, axis=0, keepdims=True)))
    return x @ w_n + bias


if __name__ == "__main__":
    # TODO(synk): the PyTorch module also *re-assigns* self.weight to the normalized
    # parameter (a training-side mutation); only the functional forward is implemented.
    key = jax.random.PRNGKey(0)
    k_x, k_w, k_x2, k_w2 = jax.random.split(key, 4)

    # Small demo shape matching the module's typical use.
    batch, in_dim, out_dim = 4, 32, 16
    weight = jax.random.uniform(k_w, (in_dim, out_dim), dtype=jnp.float32,
                                minval=0.0, maxval=1.0)
    bias = jnp.zeros((out_dim,), dtype=jnp.float32)
    x = jax.random.normal(k_x, (batch, in_dim), dtype=jnp.float32)

    out = unit_linear(x, weight, bias)
    out = jax.block_until_ready(out)
    ref = _reference(x, weight, bias)
    assert out.shape == (batch, out_dim)
    assert jnp.allclose(out, ref, atol=1e-5, rtol=1e-5)

    # A second shape exercising the multi-block grid, the fused-norm accumulator,
    # the N-padding path (500 -> 512) and the 2-way M split.
    b2, i2, o2 = 192, 384, 500
    w2 = jax.random.uniform(k_w2, (i2, o2), dtype=jnp.float32, minval=0.0, maxval=1.0)
    bias2 = 0.1 * jnp.arange(o2, dtype=jnp.float32)
    x2 = jax.random.normal(k_x2, (b2, i2), dtype=jnp.float32)

    out2 = unit_linear(x2, w2, bias2)
    out2 = jax.block_until_ready(out2)
    ref2 = _reference(x2, w2, bias2)
    assert out2.shape == (b2, o2)
    assert jnp.allclose(out2, ref2, atol=1e-4, rtol=1e-4)

    print("KERNEL_OK")
</pallas_src>

<mosaic_0001>
module attributes {stable_mosaic.version = 11 : i64} {
  func.func @unit_linear_kernel(%arg0: i32, %arg1: i32, %arg2: i32, %arg3: memref<8x128xf32, #tpu.memory_space<vmem>>, %arg4: memref<128x128xf32, #tpu.memory_space<vmem>>, %arg5: memref<1x128xf32, #tpu.memory_space<vmem>>, %arg6: memref<8x128xf32, #tpu.memory_space<vmem>>, %arg7: memref<1x128xf32, #tpu.memory_space<vmem>>) attributes {dimension_semantics = [#tpu.dimension_semantics<parallel>, #tpu.dimension_semantics<parallel>, #tpu.dimension_semantics<arbitrary>], iteration_bounds = array<i64: 1, 1, 1>, scalar_prefetch = 0 : i64, scratch_operands = 1 : i64, tpu.core_type = #tpu.core_type<tc>, window_params = [{transform_indices = @transform_0, window_bounds = array<i64: 8, 128>}, {transform_indices = @transform_1, window_bounds = array<i64: 128, 128>}, {transform_indices = @transform_2, window_bounds = array<i64: 1, 128>}, {transform_indices = @transform_3, window_bounds = array<i64: 8, 128>}]} {
    %c0_i32 = arith.constant 0 : i32
    %0 = arith.cmpi eq, %arg2, %c0_i32 : i32
    %1 = arith.extui %0 : i1 to i32
    %c0_i32_0 = arith.constant 0 : i32
    %2 = arith.cmpi ne, %1, %c0_i32_0 : i32
    scf.if %2 {
      %cst_15 = arith.constant 0.000000e+00 : f32
      %18 = vector.broadcast %cst_15 : f32 to vector<8x128xf32>
      %c0_16 = arith.constant 0 : index
      %c0_17 = arith.constant 0 : index
      %19 = vector.load %arg6[%c0_16, %c0_17] : memref<8x128xf32, #tpu.memory_space<vmem>>, vector<8x128xf32>
      tpu.vector_store %arg6[%c0_16, %c0_17], %18 {strides = array<i32>} : memref<8x128xf32, #tpu.memory_space<vmem>>, vector<8x128xf32>,
      %cst_18 = arith.constant 0.000000e+00 : f32
      %20 = vector.broadcast %cst_18 : f32 to vector<1x128xf32>
      %c0_19 = arith.constant 0 : index
      %c0_20 = arith.constant 0 : index
      %21 = vector.load %arg7[%c0_19, %c0_20] : memref<1x128xf32, #tpu.memory_space<vmem>>, vector<1x128xf32>
      tpu.vector_store %arg7[%c0_19, %c0_20], %20 {strides = array<i32>} : memref<1x128xf32, #tpu.memory_space<vmem>>, vector<1x128xf32>,
    } else {
    }
    %c0 = arith.constant 0 : index
    %c0_1 = arith.constant 0 : index
    %3 = vector.load %arg4[%c0, %c0_1] : memref<128x128xf32, #tpu.memory_space<vmem>>, vector<128x128xf32>
    %c0_2 = arith.constant 0 : index
    %c0_3 = arith.constant 0 : index
    %4 = vector.load %arg6[%c0_2, %c0_3] : memref<8x128xf32, #tpu.memory_space<vmem>>, vector<8x128xf32>
    %c0_4 = arith.constant 0 : index
    %c0_5 = arith.constant 0 : index
    %5 = vector.load %arg3[%c0_4, %c0_5] : memref<8x128xf32, #tpu.memory_space<vmem>>, vector<8x128xf32>
    %cst = arith.constant dense<0.000000e+00> : vector<8x128xf32>
    %6 = tpu.matmul %5, %3, %cst {dimension_numbers = #tpu.dot_dimension_numbers<[1], [0], [0], [1], [0, 0, 1, 1], [], []>} : vector<8x128xf32>, vector<128x128xf32>, vector<8x128xf32> -> vector<8x128xf32>
    %7 = arith.addf %4, %6 : vector<8x128xf32>
    %c0_6 = arith.constant 0 : index
    %c0_7 = arith.constant 0 : index
    %8 = vector.load %arg6[%c0_6, %c0_7] : memref<8x128xf32, #tpu.memory_space<vmem>>, vector<8x128xf32>
    tpu.vector_store %arg6[%c0_6, %c0_7], %7 {strides = array<i32>} : memref<8x128xf32, #tpu.memory_space<vmem>>, vector<8x128xf32>,
    %c0_8 = arith.constant 0 : index
    %c0_9 = arith.constant 0 : index
    %9 = vector.load %arg7[%c0_8, %c0_9] : memref<1x128xf32, #tpu.memory_space<vmem>>, vector<1x128xf32>
    %10 = arith.mulf %3, %3 : vector<128x128xf32>
    %cst_10 = arith.constant dense<0.000000e+00> : vector<128xf32>
    %11 = vector.multi_reduction <add>, %10, %cst_10 [0] : vector<128x128xf32> to vector<128xf32>
    %12 = vector.shape_cast %11 : vector<128xf32> to vector<1x128xf32>
    %13 = arith.addf %9, %12 : vector<1x128xf32>
    %c0_11 = arith.constant 0 : index
    %c0_12 = arith.constant 0 : index
    %14 = vector.load %arg7[%c0_11, %c0_12] : memref<1x128xf32, #tpu.memory_space<vmem>>, vector<1x128xf32>
    tpu.vector_store %arg7[%c0_11, %c0_12], %13 {strides = array<i32>} : memref<1x128xf32, #tpu.memory_space<vmem>>, vector<1x128xf32>,
    %c0_i32_13 = arith.constant 0 : i32
    %15 = arith.cmpi eq, %arg2, %c0_i32_13 : i32
    %16 = arith.extui %15 : i1 to i32
    %c0_i32_14 = arith.constant 0 : i32
    %17 = arith.cmpi ne, %16, %c0_i32_14 : i32
    scf.if %17 {
      %c0_15 = arith.constant 0 : index
      %c0_16 = arith.constant 0 : index
      %18 = vector.load %arg7[%c0_15, %c0_16] : memref<1x128xf32, #tpu.memory_space<vmem>>, vector<1x128xf32>
      %19 = math.sqrt %18 : vector<1x128xf32>
      %cst_17 = arith.constant 1.000000e-07 : f32
      %20 = vector.broadcast %cst_17 : f32 to vector<1x128xf32>
      %21 = arith.addf %20, %19 : vector<1x128xf32>
      %cst_18 = arith.constant 1.000000e+00 : f32
      %22 = vector.broadcast %cst_18 : f32 to vector<1x128xf32>
      %23 = arith.divf %22, %21 : vector<1x128xf32>
      %c0_19 = arith.constant 0 : index
      %c0_20 = arith.constant 0 : index
      %24 = vector.load %arg6[%c0_19, %c0_20] : memref<8x128xf32, #tpu.memory_space<vmem>>, vector<8x128xf32>
      %25 = vector.broadcast %23 : vector<1x128xf32> to vector<8x128xf32>
      %26 = arith.mulf %24, %25 : vector<8x128xf32>
      %c0_21 = arith.constant 0 : index
      %c0_22 = arith.constant 0 : index
      %27 = vector.load %arg5[%c0_21, %c0_22] : memref<1x128xf32, #tpu.memory_space<vmem>>, vector<1x128xf32>
      %28 = vector.broadcast %27 : vector<1x128xf32> to vector<8x128xf32>
      %29 = arith.addf %26, %28 : vector<8x128xf32>
      %c0_23 = arith.constant 0 : index
      %c0_24 = arith.constant 0 : index
      %30 = vector.load %arg6[%c0_23, %c0_24] : memref<8x128xf32, #tpu.memory_space<vmem>>, vector<8x128xf32>
      tpu.vector_store %arg6[%c0_23, %c0_24], %29 {strides = array<i32>} : memref<8x128xf32, #tpu.memory_space<vmem>>, vector<8x128xf32>,
    } else {
    }
    return
  }
  func.func @transform_0(%arg0: i32, %arg1: i32, %arg2: i32) -> (i32, i32) {
    %c0_i32 = arith.constant 0 : i32
    return %arg0, %arg2 : i32, i32
  }
  func.func @transform_1(%arg0: i32, %arg1: i32, %arg2: i32) -> (i32, i32) {
    %c0_i32 = arith.constant 0 : i32
    return %arg2, %arg1 : i32, i32
  }
  func.func @transform_2(%arg0: i32, %arg1: i32, %arg2: i32) -> (i32, i32) {
    %c0_i32 = arith.constant 0 : i32
    %c0_i32_0 = arith.constant 0 : i32
    return %c0_i32, %arg1 : i32, i32
  }
  func.func @transform_3(%arg0: i32, %arg1: i32, %arg2: i32) -> (i32, i32) {
    %c0_i32 = arith.constant 0 : i32
    return %arg0, %arg1 : i32, i32
  }
}

</mosaic_0001>

<llo_original>
// kernel: tpu_custom_call.1
$region0: #{tpu_custom_call.1}
  #allocation0 [shape = 'u32[]', space=smem, size = 0x4, offset = 0x4, fixed_abs, tag = 'smem constant byte address 0x4 - core index']
  #allocation1 [shape = 'u32[144,128]{1,0:T(1,128)}', space=vmem, size = 0x12000, scoped, tag = 'internal scratch']
  #allocation2 [shape = 'f32[1,128]{1,0:T(1,128)}', space=vmem, size = 0x200, scoped, tag = 'scratch operand']
  %s0 = inlined_call_operand.hbm [shape: f32[8,128], index: 0, kind: input, shape index: {}]
  %s1 = inlined_call_operand.hbm [shape: f32[128,128], index: 1, kind: input, shape index: {}]
  %s2 = inlined_call_operand.vmem [shape: f32[1,128], index: 2, kind: input, shape index: {}]
  %s3 = inlined_call_operand.hbm [shape: f32[8,128], index: 3, kind: output, shape index: {}]
  %s4 = sld [smem:[#allocation0]]
  $region38: #{tpu_custom_call.1} parent=0
    _
  %s6 = ssub.s32 1, %s4
  %s7 = scalar_select 0, %s6, %s4
  $region1: #{tpu_custom_call.1} parent=0
    #allocation3 [shape = 'u8[4096]{0}', space=vmem, size = 0x1000, scoped, tag = 'input window, operand 0, single buffered']
    #allocation4 [shape = 's32[1]{0}', space=sflag, size = 0x4, scoped, tag = 'scoped memory for tpu_custom_call.1']
    #allocation5 [shape = 's32[1]{0}', space=sflag, size = 0x4, scoped, tag = 'scoped memory for tpu_custom_call.1']
    #allocation6 [shape = 'u8[65536]{0}', space=vmem, size = 0x10000, scoped, tag = 'input window, operand 1, single buffered']
    #allocation7 [shape = 's32[1]{0}', space=sflag, size = 0x4, scoped, tag = 'scoped memory for tpu_custom_call.1']
    #allocation8 [shape = 'u8[4096]{0}', space=vmem, size = 0x1000, scoped, tag = 'output window, operand 0, single buffered']
    %8 = vsyncpa [#allocation4], 0
    %9 = vsyncpa [#allocation7], 0
    %10 = vsyncpa [#allocation5], 0
    // Predicated region
    $region2: #{tpu_custom_call.1} parent=1 // pred_check
      _
    $region3: #{tpu_custom_call.1} parent=1 // pred_check_branch
      %12 = sbr.rel (0) target = $region5
    $region4: #{tpu_custom_call.1} parent=1 // pred_region
      %s14 = ssub.s32 128, 128
      %15 = vsyncadd [#allocation4], %s14
      %s17 = sshll.u32 [#allocation3], 4
      %s18 = int_to_ptr.vmem [resolvable:$true] %s17
      %20 = dma.hbm_to_vmem [thread:$0]  %s0, 128, %s18, [#allocation4]
    $region5: #{tpu_custom_call.1} parent=1 // pred_fallthru
      _
    // Predicated region
    $region6: #{tpu_custom_call.1} parent=1 // pred_check
      _
    $region7: #{tpu_custom_call.1} parent=1 // pred_check_branch
      %22 = sbr.rel (0) target = $region9
    $region8: #{tpu_custom_call.1} parent=1 // pred_region
      %s24 = ssub.s32 2048, 2048
      %25 = vsyncadd [#allocation7], %s24
      %s26 = sshll.u32 [#allocation6], 4
      %s27 = int_to_ptr.vmem [resolvable:$true] %s26
      %32 = dma.hbm_to_vmem [thread:$0]  %s1, 2048, %s27, [#allocation7], 128, 128, 8
    $region9: #{tpu_custom_call.1} parent=1 // pred_fallthru
      _
    // Predicated region
    $region10: #{tpu_custom_call.1} parent=1 // pred_check
      _
    $region11: #{tpu_custom_call.1} parent=1 // pred_check_branch
      %34 = sbr.rel (0) target = $region13
    $region12: #{tpu_custom_call.1} parent=1 // pred_region
      _
    $region13: #{tpu_custom_call.1} parent=1 // pred_fallthru
      _
    // Predicated region
    $region14: #{tpu_custom_call.1} parent=1 // pred_check
      _
    $region15: #{tpu_custom_call.1} parent=1 // pred_check_branch
      %36 = sbr.rel (0) target = $region17
    $region16: #{tpu_custom_call.1} parent=1 // pred_region
      %37 = dma.done [#allocation4], 128
    $region17: #{tpu_custom_call.1} parent=1 // pred_fallthru
      _
    // Predicated region
    $region18: #{tpu_custom_call.1} parent=1 // pred_check
      _
    $region19: #{tpu_custom_call.1} parent=1 // pred_check_branch
      %39 = sbr.rel (0) target = $region21
    $region20: #{tpu_custom_call.1} parent=1 // pred_region
      %40 = dma.done [#allocation7], 2048
    $region21: #{tpu_custom_call.1} parent=1 // pred_fallthru
      _
    %p41 = scmp.eq.s32.totalorder 0, 0
    // Predicated region
    $region22: #{tpu_custom_call.1} parent=1 // pred_check
      %p42 = pneg %p41
    $region23: #{tpu_custom_call.1} parent=1 // pred_check_branch
      %44 = sbr.rel (%p42) target = $region25
    $region24: #{tpu_custom_call.1} parent=1 // pred_region
      %45 = vst [vmem:[#allocation8] sm:$0xff] 0.0
      %46 = vst [vmem:[#allocation2] sm:$0x1] 0.0
    $region25: #{tpu_custom_call.1} parent=1 // pred_fallthru
      _
    %v47 = vld [vmem:[#allocation6] sm:$0xff]
    %v48 = vld [vmem:[#allocation6 + $0x8] sm:$0xff]
    %v49 = vld [vmem:[#allocation6 + $0x10] sm:$0xff]
    %v50 = vld [vmem:[#allocation6 + $0x18] sm:$0xff]
    %v51 = vld [vmem:[#allocation6 + $0x20] sm:$0xff]
    %v52 = vld [vmem:[#allocation6 + $0x28] sm:$0xff]
    %v53 = vld [vmem:[#allocation6 + $0x30] sm:$0xff]
    %v54 = vld [vmem:[#allocation6 + $0x38] sm:$0xff]
    %v55 = vld [vmem:[#allocation6 + $0x40] sm:$0xff]
    %v56 = vld [vmem:[#allocation6 + $0x48] sm:$0xff]
    %v57 = vld [vmem:[#allocation6 + $0x50] sm:$0xff]
    %v58 = vld [vmem:[#allocation6 + $0x58] sm:$0xff]
    %v59 = vld [vmem:[#allocation6 + $0x60] sm:$0xff]
    %v60 = vld [vmem:[#allocation6 + $0x68] sm:$0xff]
    %v61 = vld [vmem:[#allocation6 + $0x70] sm:$0xff]
    %v62 = vld [vmem:[#allocation6 + $0x78] sm:$0xff]
    %v63 = vld [vmem:[#allocation8] sm:$0xff]
    %v64 = vld [vmem:[#allocation3] sm:$0xff]
    %65 = vmatprep.subr.mxu0 0.0
    %66 = vmatpush1.msra.mxu0 %v62
    %67 = vmatprep.subr.mxu0 0.0
    %68 = vmatpush1.msra.mxu0 %v61
    %69 = vmatprep.subr.mxu0 0.0
    %70 = vmatpush1.msra.mxu0 %v60
    %71 = vmatprep.subr.mxu0 0.0
    %72 = vmatpush1.msra.mxu0 %v59
    %73 = vmatprep.subr.mxu0 0.0
    %74 = vmatpush1.msra.mxu0 %v58
    %75 = vmatprep.subr.mxu0 0.0
    %76 = vmatpush1.msra.mxu0 %v57
    %77 = vmatprep.subr.mxu0 0.0
    %78 = vmatpush1.msra.mxu0 %v56
    %79 = vmatprep.subr.mxu0 0.0
    %80 = vmatpush1.msra.mxu0 %v55
    %81 = vmatprep.subr.mxu0 0.0
    %82 = vmatpush1.msra.mxu0 %v54
    %83 = vmatprep.subr.mxu0 0.0
    %84 = vmatpush1.msra.mxu0 %v53
    %85 = vmatprep.subr.mxu0 0.0
    %86 = vmatpush1.msra.mxu0 %v52
    %87 = vmatprep.subr.mxu0 0.0
    %88 = vmatpush1.msra.mxu0 %v51
    %89 = vmatprep.subr.mxu0 0.0
    %90 = vmatpush1.msra.mxu0 %v50
    %91 = vmatprep.subr.mxu0 0.0
    %92 = vmatpush1.msra.mxu0 %v49
    %93 = vmatprep.subr.mxu0 0.0
    %94 = vmatpush1.msra.mxu0 %v48
    %95 = vmatprep.subr.mxu0 0.0
    %96 = vmatpush1.msra.mxu0 %v47
    %97 = vmatprep.subr.mxu0 0.0
    %98 = vmatpush2.msra.mxu0 0.0
    %99 = vmatprep.subr.mxu0 0.0
    %100 = vmatpush2.msra.mxu0 0.0
    %101 = vmatprep.subr.mxu0 0.0
    %102 = vmatpush2.msra.mxu0 0.0
    %103 = vmatprep.subr.mxu0 0.0
    %104 = vmatpush2.msra.mxu0 0.0
    %105 = vmatprep.subr.mxu0 0.0
    %106 = vmatpush2.msra.mxu0 0.0
    %107 = vmatprep.subr.mxu0 0.0
    %108 = vmatpush2.msra.mxu0 0.0
    %109 = vmatprep.subr.mxu0 0.0
    %110 = vmatpush2.msra.mxu0 0.0
    %111 = vmatprep.subr.mxu0 0.0
    %112 = vmatpush2.msra.mxu0 0.0
    %113 = vmatprep.subr.mxu0 0.0
    %114 = vmatpush2.msra.mxu0 0.0
    %115 = vmatprep.subr.mxu0 0.0
    %116 = vmatpush2.msra.mxu0 0.0
    %117 = vmatprep.subr.mxu0 0.0
    %118 = vmatpush2.msra.mxu0 0.0
    %119 = vmatprep.subr.mxu0 0.0
    %120 = vmatpush2.msra.mxu0 0.0
    %121 = vmatprep.subr.mxu0 0.0
    %122 = vmatpush2.msra.mxu0 0.0
    %123 = vmatprep.subr.mxu0 0.0
    %124 = vmatpush2.msra.mxu0 0.0
    %125 = vmatprep.subr.mxu0 0.0
    %126 = vmatpush2.msra.mxu0 0.0
    %127 = vmatprep.subr.mxu0 0.0
    %128 = vmatpush2.msra.mxu0 0.0
    %129 = vmatprep.mubr.f32.mxu0 0.0
    %130 = vmatmul.mubr.f32.gmra.mxu0 %v64
    %v131 = vpop.f32.mrf.mxu0
    %v132 = vadd.f32 0.0, %v131
    %v133 = vpop.f32.mrf.mxu0
    %134 = vdwg.mxu0
    %v135 = vadd.f32 %v63, %v132
    %136 = vst [vmem:[#allocation8] sm:$0xff] %v135
    %v137 = vld [vmem:[#allocation2] sm:$0x1]
    %v138 = vmul.f32 %v47, %v47
    %v139 = vmul.f32 %v48, %v48
    %v140 = vmul.f32 %v49, %v49
    %v141 = vmul.f32 %v50, %v50
    %v142 = vmul.f32 %v51, %v51
    %v143 = vmul.f32 %v52, %v52
    %v144 = vmul.f32 %v53, %v53
    %v145 = vmul.f32 %v54, %v54
    %v146 = vmul.f32 %v55, %v55
    %v147 = vmul.f32 %v56, %v56
    %v148 = vmul.f32 %v57, %v57
    %v149 = vmul.f32 %v58, %v58
    %v150 = vmul.f32 %v59, %v59
    %v151 = vmul.f32 %v60, %v60
    %v152 = vmul.f32 %v61, %v61
    %v153 = vmul.f32 %v62, %v62
    %v154 = vadd.f32 %v138, %v139
    %v155 = vadd.f32 %v154, %v140
    %v156 = vadd.f32 %v155, %v141
    %v157 = vadd.f32 %v156, %v142
    %v158 = vadd.f32 %v157, %v143
    %v159 = vadd.f32 %v158, %v144
    %v160 = vadd.f32 %v159, %v145
    %v161 = vadd.f32 %v160, %v146
    %v162 = vadd.f32 %v161, %v147
    %v163 = vadd.f32 %v162, %v148
    %v164 = vadd.f32 %v163, %v149
    %v165 = vadd.f32 %v164, %v150
    %v166 = vadd.f32 %v165, %v151
    %v167 = vadd.f32 %v166, %v152
    %v168 = vadd.f32 %v167, %v153
    %v169 = vrot.slane %v168, 4
    %v170 = vadd.f32 %v168, %v169
    %v171 = vrot.slane %v170, 2
    %v172 = vadd.f32 %v170, %v171
    %v173 = vrot.slane %v172, 1
    %v174 = vadd.f32 %v172, %v173
    %v175 = vadd.f32 %v137, %v174
    %176 = vst [vmem:[#allocation2] sm:$0x1] %v175
    // Predicated region
    $region26: #{tpu_custom_call.1} parent=1 // pred_check
      %p177 = pneg %p41
    $region27: #{tpu_custom_call.1} parent=1 // pred_check_branch
      %179 = sbr.rel (%p177) target = $region29
    $region28: #{tpu_custom_call.1} parent=1 // pred_region
      %v180 = vld [vmem:[#allocation2] sm:$0x1]
      %v181 = vrsqrt.pop %v180
      %v182 = vmul.f32 %v180, %v181
      %vm183 = vcmp.eq.f32.partialorder %v180, inf
      %v184 = vsel %vm183, %v180, %v182
      %vm185 = vcmp.eq.f32.partialorder %v180, 0.0
      %v186 = vand.u32 %v180, 2147483648
      %v187 = vsel %vm185, %v186, %v184
      %v188 = vadd.f32 %v187, 1e-07
      %v189 = vrcp.pop %v188
      %v190 = vmul.f32 1.0, %v189
      %v191 = vld [vmem:[#allocation8] sm:$0xff]
      %v193 = vlaneseq
      %v194 = vshrl.u32 %v193, 7
      %v195 = vsub.s32 0, %v194
      %v196 = vrot.slane %v190, %v195
      %v198 = vmul.f32 %v191, %v196
      %v199 = vld [vmem:[%s2] sm:$0x1]
      %v201 = vlaneseq
      %v202 = vshrl.u32 %v201, 7
      %v203 = vsub.s32 0, %v202
      %v204 = vrot.slane %v199, %v203
      %v206 = vadd.f32 %v198, %v204
      %207 = vst [vmem:[#allocation8] sm:$0xff] %v206
    $region29: #{tpu_custom_call.1} parent=1 // pred_fallthru
      _
    // Predicated region
    $region30: #{tpu_custom_call.1} parent=1 // pred_check
      _
    $region31: #{tpu_custom_call.1} parent=1 // pred_check_branch
      %209 = sbr.rel (0) target = $region33
    $region32: #{tpu_custom_call.1} parent=1 // pred_region
      %s211 = ssub.s32 128, 128
      %212 = vsyncadd [#allocation5], %s211
      %s214 = sshll.u32 [#allocation8], 4
      %s215 = int_to_ptr.vmem [resolvable:$true] %s214
      %217 = dma.vmem_to_hbm [thread:$0]  %s215, 128, %s3, [#allocation5]
    $region33: #{tpu_custom_call.1} parent=1 // pred_fallthru
      _
    // Predicated region
    $region34: #{tpu_custom_call.1} parent=1 // pred_check
      _
    $region35: #{tpu_custom_call.1} parent=1 // pred_check_branch
      %219 = sbr.rel (0) target = $region37
    $region36: #{tpu_custom_call.1} parent=1 // pred_region
      %220 = dma.done [#allocation5], 128
    $region37: #{tpu_custom_call.1} parent=1 // pred_fallthru
      _
    %221 = vsyncpa [#allocation4], 1
    %222 = vsyncpa [#allocation7], 1
    %223 = vsyncpa [#allocation5], 1

</llo_original>
